<compile_context>
chip_gen: v6e
topology: v6e:2x2x1
jax: 0.10.0
libtpu: 0.0.40
codegen_flags: <defaults>
</compile_context>

<pallas_src>
import numpy as np
import jax
import jax.numpy as jnp
from jax.experimental import pallas as pl
from jax.experimental.pallas import tpu as pltpu

NEG_SLOPE_ACT = 0.01   # nn.LeakyReLU() default (self.act / GCNLayer.c_act)
NEG_SLOPE_ATT = 0.2    # leaky-relu slope used inside the attention logits


def _leaky(x, slope):
    return jnp.where(x >= 0, x, slope * x)


def _vmem():
    return pl.BlockSpec(memory_space=pltpu.MemorySpace.VMEM)


# ----------------------------- Pallas kernels -----------------------------

def _gcn_kernel(x_ref, a_ref, w1_ref, b1_ref, w2_ref, b2_ref, o_ref):
    """Whole GCNLayer (conv -> LeakyReLU -> conv), channels folded into lanes."""
    a = a_ref[...]                                              # [Nc, Nc]
    h = jnp.dot(x_ref[...], w1_ref[...], preferred_element_type=jnp.float32)
    h = jnp.dot(a, h, preferred_element_type=jnp.float32) + b1_ref[...]
    h = _leaky(h, NEG_SLOPE_ACT)
    h = jnp.dot(h, w2_ref[...], preferred_element_type=jnp.float32)
    h = jnp.dot(a, h, preferred_element_type=jnp.float32) + b2_ref[...]
    o_ref[...] = h.astype(o_ref.dtype)                          # [Nc, C*H2]


def _transform_kernel(x_ref, w_ref, o_ref):
    """[h_all | q/k scores | (lin residual)] = feat @ combined block-diag W."""
    o_ref[...] = jnp.dot(x_ref[...], w_ref[...],
                         preferred_element_type=jnp.float32).astype(o_ref.dtype)


def _aggregate_act_kernel(scatter_ref, msg_ref, bias_ref, o_ref):
    """scatter @ (alpha-scaled messages) + bias, then LeakyReLU (conv1)."""
    acc = jnp.dot(scatter_ref[...], msg_ref[...],
                  preferred_element_type=jnp.float32) + bias_ref[...]
    o_ref[...] = _leaky(acc, NEG_SLOPE_ACT).astype(o_ref.dtype)


def _aggregate_residual_kernel(scatter_ref, msg_ref, bias_ref, res_ref, o_ref):
    """scatter @ messages + (conv2 bias + lin bias) + folded-in lin residual."""
    acc = jnp.dot(scatter_ref[...], msg_ref[...],
                  preferred_element_type=jnp.float32)
    o_ref[...] = (acc + bias_ref[...] + res_ref[...]).astype(o_ref.dtype)


# ------------------------------ Layer wrappers -----------------------------

def gcn_norm_adj(edge_index, num_nodes):
    """Dense D^-1/2 (A + remaining self-loops) D^-1/2 (PyG gcn_norm)."""
    src, dst = edge_index[0], edge_index[1]
    A = jnp.zeros((num_nodes, num_nodes), jnp.float32).at[dst, src].add(1.0)
    diag = jnp.diagonal(A)
    A = A + jnp.diag(jnp.where(diag > 0, 0.0, 1.0))   # add_remaining_self_loops
    deg = A.sum(axis=1)
    dinv = jnp.where(deg > 0, 1.0 / jnp.sqrt(deg), 0.0)
    return dinv[:, None] * A * dinv[None, :]


def gcn_layer_folded(p, x_cf, a_hat, C):
    """GCNLayer for all ccle channels at once (one gridless pallas_call)."""
    Nc = x_cf.shape[0]
    H2 = p["w2"].shape[1]
    eye_c = jnp.eye(C, dtype=jnp.float32)
    w1_bd = jnp.kron(eye_c, p["w1"].astype(jnp.float32))        # [C*Cin, C*H1]
    w2_bd = jnp.kron(eye_c, p["w2"].astype(jnp.float32))        # [C*H1, C*H2]
    b1_t = jnp.tile(p["b1"].astype(jnp.float32), C)[None, :]
    b2_t = jnp.tile(p["b2"].astype(jnp.float32), C)[None, :]
    return pl.pallas_call(
        _gcn_kernel,
        out_shape=jax.ShapeDtypeStruct((Nc, C * H2), jnp.float32),
        in_specs=[_vmem()] * 6,
        out_specs=_vmem(),
    )(x_cf, a_hat, w1_bd, b1_t, w2_bd, b2_t)


def _rgat_combined_weight(p, heads, C, lin_w=None):
    """Per-channel [W_cat | q-proj | k-proj | (lin)] padded to a multiple of
    128 lanes, then block-diagonal over channels. All static weight algebra."""
    R, Cin, Cout = p["W"].shape
    D = Cout // heads
    W = p["W"].astype(jnp.float32)
    W_cat = jnp.transpose(W, (1, 0, 2)).reshape(Cin, R * Cout)  # (r, h, d) cols
    W_hd = W.reshape(R, Cin, heads, D)
    q_w = jnp.einsum("rkhd,rhd->krh", W_hd,
                     p["att_q"].astype(jnp.float32)).reshape(Cin, R * heads)
    k_w = jnp.einsum("rkhd,rhd->krh", W_hd,
                     p["att_k"].astype(jnp.float32)).reshape(Cin, R * heads)
    cols = [W_cat, q_w, k_w]
    if lin_w is not None:
        cols.append(lin_w.astype(jnp.float32))
    Wc = jnp.concatenate(cols, axis=1)
    width = Wc.shape[1]
    padw = width + ((-width) % 128)                # lane-dense output slab
    Wc = jnp.pad(Wc, ((0, 0), (0, padw - width)))
    W_bd = jnp.kron(jnp.eye(C, dtype=jnp.float32), Wc)
    return W_bd, padw


def rgat_transform(x_cf, w_bd, out_width):
    N = x_cf.shape[0]
    return pl.pallas_call(
        _transform_kernel,
        out_shape=jax.ShapeDtypeStruct((N, out_width), jnp.float32),
        in_specs=[_vmem()] * 2,
        out_specs=_vmem(),
    )(x_cf, w_bd)


def rgat_aggregate(scatter, msg, bias_t, residual=None):
    N = scatter.shape[0]
    W = msg.shape[1]
    if residual is None:
        return pl.pallas_call(
            _aggregate_act_kernel,
            out_shape=jax.ShapeDtypeStruct((N, W), jnp.float32),
            in_specs=[_vmem()] * 3,
            out_specs=_vmem(),
        )(scatter, msg, bias_t)
    return pl.pallas_call(
        _aggregate_residual_kernel,
        out_shape=jax.ShapeDtypeStruct((N, W), jnp.float32),
        in_specs=[_vmem()] * 4,
        out_specs=_vmem(),
    )(scatter, msg, bias_t, residual)


def rgat_messages(p, x_cf, src, dst, edge_type, heads, C, lin_w=None):
    """One fused transform pallas_call + irregular softmax glue (E-leading).

    Returns alpha-scaled messages [E, C*Cout], attention alpha [E, C, heads],
    and (optionally) the folded-in residual Linear output [N, C*lin_out]."""
    # TODO(synk): PyG RGATConv extras (attention_mode variants, edge features,
    #             within-relation softmax) are not reproduced.
    N = x_cf.shape[0]
    R, Cin, Cout = p["W"].shape
    D = Cout // heads
    E = src.shape[0]

    W_bd, padw = _rgat_combined_weight(p, heads, C, lin_w=lin_w)
    slab = rgat_transform(x_cf, W_bd, C * padw).reshape(N, C, padw)

    h = slab[:, :, :R * Cout]                                   # [N, C, R*Cout]
    q = slab[:, :, R * Cout: R * Cout + R * heads]
    k = slab[:, :, R * Cout + R * heads: R * Cout + 2 * R * heads]
    lin_res = None
    if lin_w is not None:
        off = R * Cout + 2 * R * heads
        lin_out = lin_w.shape[1]
        lin_res = slab[:, :, off: off + lin_out].reshape(N, C * lin_out)

    # irregular attention glue (gathers + segment softmax), edge axis leading
    idx3 = edge_type[:, None, None, None]
    q_e = jnp.take_along_axis(q.reshape(N, C, R, heads)[dst], idx3,
                              axis=2)[:, :, 0, :]               # [E, C, H]
    k_e = jnp.take_along_axis(k.reshape(N, C, R, heads)[src], idx3,
                              axis=2)[:, :, 0, :]
    logit = _leaky(q_e + k_e, NEG_SLOPE_ATT)
    seg_max = jax.ops.segment_max(logit, dst, num_segments=N)
    z = jnp.exp(logit - seg_max[dst])
    denom = jax.ops.segment_sum(z, dst, num_segments=N)
    alpha = z / (denom[dst] + 1e-16)                            # [E, C, H]

    idx5 = edge_type[:, None, None, None, None]
    h_e = jnp.take_along_axis(h.reshape(N, C, R, heads, D)[src], idx5,
                              axis=2)[:, :, 0]                  # [E, C, H, D]
    msg = (h_e * alpha[..., None]).reshape(E, C * Cout)         # lane-dense
    return msg, alpha, lin_res


# ------------------------------- MyModel ----------------------------------

def init_params(key, *, ccle_in=4, gcn_hidden=32, gcn_out=128,
                kg_dim=128, hidden_channels=64, out_channels=128,
                heads=2, num_relations=3):
    in_channels = kg_dim + gcn_out        # concat(kg_emb, ccle_gcn_out)
    ks = jax.random.split(key, 9)

    def w(k, shape, scale):
        return jax.random.normal(k, shape, jnp.float32) * scale

    return {
        "ccle_layer": {
            "w1": w(ks[0], (ccle_in, gcn_hidden), 0.5),
            "b1": jnp.zeros((gcn_hidden,), jnp.float32),
            "w2": w(ks[1], (gcn_hidden, gcn_out), 0.2),
            "b2": jnp.zeros((gcn_out,), jnp.float32),
        },
        "conv1": {
            "W": w(ks[2], (num_relations, in_channels, hidden_channels), 0.05),
            "att_q": w(ks[3], (num_relations, heads, hidden_channels // heads), 0.1),
            "att_k": w(ks[4], (num_relations, heads, hidden_channels // heads), 0.1),
            "bias": jnp.zeros((hidden_channels,), jnp.float32),
        },
        "conv2": {
            "W": w(ks[5], (num_relations, hidden_channels, out_channels), 0.1),
            "att_q": w(ks[6], (num_relations, heads, out_channels // heads), 0.1),
            "att_k": w(ks[7], (num_relations, heads, out_channels // heads), 0.1),
            "bias": jnp.zeros((out_channels,), jnp.float32),
        },
        "lin": {
            "w": w(ks[8], (in_channels, out_channels), 0.05),
            "b": jnp.zeros((out_channels,), jnp.float32),
        },
        # fc1/fc2/fc3 of MyModel are only used by .decode(), not by forward().
    }


def my_model_forward(params, kg_emb, ccle, node_id, neighbor_cl_ids,
                     edge_index, edge_type, *, heads=2):
    # Distinct ccle channels -> folded into the lane axis (no per-channel loop)
    uniq = [int(c) for c in np.unique(np.asarray(neighbor_cl_ids)).tolist()]
    C = len(uniq)

    src, dst = edge_index[0], edge_index[1]
    edge_type = edge_type.astype(jnp.int32)

    ccle_cf = jnp.concatenate([ccle[c].astype(jnp.float32) for c in uniq],
                              axis=1)                           # [Nc, C*4]
    n_ccle = ccle_cf.shape[0]
    # TODO(synk): dense adjacency / one-hot scatter are only viable for small
    #             graphs; tile E/N on an "arbitrary" grid axis (with a
    #             pl.when-zeroed VMEM accumulator) once N/E grow.
    a_hat = gcn_norm_adj(edge_index, n_ccle)

    gcn_out = gcn_layer_folded(params["ccle_layer"], ccle_cf, a_hat, C)

    N = node_id.shape[0]
    kg_dim = kg_emb.shape[1]
    gcn_dim = params["ccle_layer"]["w2"].shape[1]
    kg_sel = kg_emb[node_id].astype(jnp.float32)                # [N, kg_dim]
    gcn_sel = gcn_out[node_id].reshape(N, C, gcn_dim)
    feat_cf = jnp.concatenate(
        [jnp.broadcast_to(kg_sel[:, None, :], (N, C, kg_dim)), gcn_sel],
        axis=-1).reshape(N, C * (kg_dim + gcn_dim))             # [N, C*Cin]

    scatter = jax.nn.one_hot(dst, N, dtype=jnp.float32).T       # [N, E]

    # conv1 (the conv2 residual Linear is folded into its transform matmul)
    msg1, alpha1, lin_res = rgat_messages(params["conv1"], feat_cf, src, dst,
                                          edge_type, heads, C,
                                          lin_w=params["lin"]["w"])
    bias1_t = jnp.tile(params["conv1"]["bias"].astype(jnp.float32), C)[None, :]
    x1 = rgat_aggregate(scatter, msg1, bias1_t)                 # [N, C*hidden]
    # TODO(synk): nn.Dropout is identity in eval mode; train-mode dropout omitted.

    # conv2 (+ residual add fused into the aggregate kernel epilogue)
    msg2, alpha2, _ = rgat_messages(params["conv2"], x1, src, dst,
                                    edge_type, heads, C)
    out_ch = params["conv2"]["W"].shape[2]
    bias2_t = jnp.tile(params["conv2"]["bias"].astype(jnp.float32)
                       + params["lin"]["b"].astype(jnp.float32), C)[None, :]
    x2 = rgat_aggregate(scatter, msg2, bias2_t, residual=lin_res)  # [N, C*out]

    x_dict, attn1_dict, attn2_dict = {}, {}, {}
    for i, c in enumerate(uniq):
        x_dict[c] = x2[:, i * out_ch:(i + 1) * out_ch]
        attn1_dict[c] = (edge_index, alpha1[:, i, :])
        attn2_dict[c] = (edge_index, alpha2[:, i, :])
    return x_dict, attn1_dict, attn2_dict


if __name__ == "__main__":
    key = jax.random.PRNGKey(0)
    N, E, R, heads = 16, 32, 3, 2
    kg_dim, ccle_dim = 128, 4

    k1, k2, k3, k4, k5, kp = jax.random.split(key, 6)
    kg_emb = jax.random.normal(k1, (N, kg_dim), jnp.float32)
    ccle = {
        0: jax.random.normal(k2, (N, ccle_dim), jnp.float32),
        1: jax.random.normal(k3, (N, ccle_dim), jnp.float32),
    }
    node_id = jnp.arange(N)
    neighbor_cl_ids = jnp.array([0, 1, 0, 1, 1, 0], dtype=jnp.int32)
    edge_index = jax.random.randint(k4, (2, E), 0, N)
    edge_type = jax.random.randint(k5, (E,), 0, R)

    params = init_params(kp, kg_dim=kg_dim, heads=heads, num_relations=R)

    out = my_model_forward(params, kg_emb, ccle, node_id, neighbor_cl_ids,
                           edge_index, edge_type, heads=heads)
    jax.block_until_ready(out)
    x_dict, attn1_dict, attn2_dict = out
    assert x_dict[0].shape == (N, 128) and x_dict[1].shape == (N, 128)
    assert attn1_dict[0][1].shape == (E, heads)
    assert attn2_dict[1][1].shape == (E, heads)
    assert all(bool(jnp.all(jnp.isfinite(x_dict[c]))) for c in x_dict)
    print("KERNEL_OK")
</pallas_src>

<mosaic_0001>
module attributes {stable_mosaic.version = 11 : i64} {
  func.func @_gcn_kernel(%arg0: memref<16x8xf32, #tpu.memory_space<vmem>>, %arg1: memref<16x16xf32, #tpu.memory_space<vmem>>, %arg2: memref<8x64xf32, #tpu.memory_space<vmem>>, %arg3: memref<1x64xf32, #tpu.memory_space<vmem>>, %arg4: memref<64x256xf32, #tpu.memory_space<vmem>>, %arg5: memref<1x256xf32, #tpu.memory_space<vmem>>, %arg6: memref<16x256xf32, #tpu.memory_space<vmem>>) attributes {dimension_semantics = [], scalar_prefetch = 0 : i64, scratch_operands = 0 : i64, tpu.core_type = #tpu.core_type<tc>} {
    %c0 = arith.constant 0 : index
    %c0_0 = arith.constant 0 : index
    %0 = vector.load %arg1[%c0, %c0_0] : memref<16x16xf32, #tpu.memory_space<vmem>>, vector<16x16xf32>
    %c0_1 = arith.constant 0 : index
    %c0_2 = arith.constant 0 : index
    %1 = vector.load %arg0[%c0_1, %c0_2] : memref<16x8xf32, #tpu.memory_space<vmem>>, vector<16x8xf32>
    %c0_3 = arith.constant 0 : index
    %c0_4 = arith.constant 0 : index
    %2 = vector.load %arg2[%c0_3, %c0_4] : memref<8x64xf32, #tpu.memory_space<vmem>>, vector<8x64xf32>
    %cst = arith.constant dense<0.000000e+00> : vector<16x64xf32>
    %3 = tpu.matmul %1, %2, %cst {dimension_numbers = #tpu.dot_dimension_numbers<[1], [0], [0], [1], [0, 0, 1, 1], [], []>} : vector<16x8xf32>, vector<8x64xf32>, vector<16x64xf32> -> vector<16x64xf32>
    %cst_5 = arith.constant dense<0.000000e+00> : vector<16x64xf32>
    %4 = tpu.matmul %0, %3, %cst_5 {dimension_numbers = #tpu.dot_dimension_numbers<[1], [0], [0], [1], [0, 0, 1, 1], [], []>} : vector<16x16xf32>, vector<16x64xf32>, vector<16x64xf32> -> vector<16x64xf32>
    %c0_6 = arith.constant 0 : index
    %c0_7 = arith.constant 0 : index
    %5 = vector.load %arg3[%c0_6, %c0_7] : memref<1x64xf32, #tpu.memory_space<vmem>>, vector<1x64xf32>
    %6 = vector.broadcast %5 : vector<1x64xf32> to vector<16x64xf32>
    %7 = arith.addf %4, %6 : vector<16x64xf32>
    %cst_8 = arith.constant 0.000000e+00 : f32
    %8 = vector.broadcast %cst_8 : f32 to vector<16x64xf32>
    %9 = arith.cmpf oge, %7, %8 : vector<16x64xf32>
    %cst_9 = arith.constant 0.00999999977 : f32
    %10 = vector.broadcast %cst_9 : f32 to vector<16x64xf32>
    %11 = arith.mulf %10, %7 : vector<16x64xf32>
    %12 = arith.select %9, %7, %11 : vector<16x64xi1>, vector<16x64xf32>
    %c0_10 = arith.constant 0 : index
    %c0_11 = arith.constant 0 : index
    %13 = vector.load %arg4[%c0_10, %c0_11] : memref<64x256xf32, #tpu.memory_space<vmem>>, vector<64x256xf32>
    %cst_12 = arith.constant dense<0.000000e+00> : vector<16x256xf32>
    %14 = tpu.matmul %12, %13, %cst_12 {dimension_numbers = #tpu.dot_dimension_numbers<[1], [0], [0], [1], [0, 0, 1, 1], [], []>} : vector<16x64xf32>, vector<64x256xf32>, vector<16x256xf32> -> vector<16x256xf32>
    %cst_13 = arith.constant dense<0.000000e+00> : vector<16x256xf32>
    %15 = tpu.matmul %0, %14, %cst_13 {dimension_numbers = #tpu.dot_dimension_numbers<[1], [0], [0], [1], [0, 0, 1, 1], [], []>} : vector<16x16xf32>, vector<16x256xf32>, vector<16x256xf32> -> vector<16x256xf32>
    %c0_14 = arith.constant 0 : index
    %c0_15 = arith.constant 0 : index
    %16 = vector.load %arg5[%c0_14, %c0_15] : memref<1x256xf32, #tpu.memory_space<vmem>>, vector<1x256xf32>
    %17 = vector.broadcast %16 : vector<1x256xf32> to vector<16x256xf32>
    %18 = arith.addf %15, %17 : vector<16x256xf32>
    %c0_16 = arith.constant 0 : index
    %c0_17 = arith.constant 0 : index
    %19 = vector.load %arg6[%c0_16, %c0_17] : memref<16x256xf32, #tpu.memory_space<vmem>>, vector<16x256xf32>
    tpu.vector_store %arg6[%c0_16, %c0_17], %18 {strides = array<i32>} : memref<16x256xf32, #tpu.memory_space<vmem>>, vector<16x256xf32>,
    return
  }
}

</mosaic_0001>

<llo_original>
// kernel: tpu_custom_call.1
$region0: #{tpu_custom_call.1}
  #allocation0 [shape = 'u32[]', space=smem, size = 0x4, offset = 0x4, fixed_abs, tag = 'smem constant byte address 0x4 - core index']
  #allocation1 [shape = 'u32[144,128]{1,0:T(1,128)}', space=vmem, size = 0x12000, scoped, tag = 'internal scratch']
  %s0 = inlined_call_operand.vmem [shape: f32[16,8], index: 0, kind: input, shape index: {}]
  %s1 = inlined_call_operand.vmem [shape: f32[16,16], index: 1, kind: input, shape index: {}]
  %s2 = inlined_call_operand.vmem [shape: f32[8,64], index: 2, kind: input, shape index: {}]
  %s3 = inlined_call_operand.vmem [shape: f32[1,64], index: 3, kind: input, shape index: {}]
  %s4 = inlined_call_operand.hbm [shape: f32[64,256], index: 4, kind: input, shape index: {}]
  %s5 = inlined_call_operand.vmem [shape: f32[1,256], index: 5, kind: input, shape index: {}]
  %s6 = inlined_call_operand.hbm [shape: f32[16,256], index: 6, kind: output, shape index: {}]
  %s7 = sld [smem:[#allocation0]]
  $region38: #{tpu_custom_call.1} parent=0
    _
  %s9 = ssub.s32 1, %s7
  %s10 = scalar_select 0, %s9, %s7
  $region1: #{tpu_custom_call.1} parent=0
    #allocation2 [shape = 'u8[65536]{0}', space=vmem, size = 0x10000, scoped, tag = 'input window, operand 4, single buffered']
    #allocation3 [shape = 's32[1]{0}', space=sflag, size = 0x4, scoped, tag = 'scoped memory for tpu_custom_call.1']
    #allocation4 [shape = 's32[1]{0}', space=sflag, size = 0x4, scoped, tag = 'scoped memory for tpu_custom_call.1']
    #allocation5 [shape = 'u8[16384]{0}', space=vmem, size = 0x4000, scoped, tag = 'output window, operand 0, single buffered']
    %11 = vsyncpa [#allocation3], 0
    %12 = vsyncpa [#allocation4], 0
    // Predicated region
    $region2: #{tpu_custom_call.1} parent=1 // pred_check
      _
    $region3: #{tpu_custom_call.1} parent=1 // pred_check_branch
      %14 = sbr.rel (0) target = $region5
    $region4: #{tpu_custom_call.1} parent=1 // pred_region
      _
    $region5: #{tpu_custom_call.1} parent=1 // pred_fallthru
      _
    // Predicated region
    $region6: #{tpu_custom_call.1} parent=1 // pred_check
      _
    $region7: #{tpu_custom_call.1} parent=1 // pred_check_branch
      %16 = sbr.rel (0) target = $region9
    $region8: #{tpu_custom_call.1} parent=1 // pred_region
      _
    $region9: #{tpu_custom_call.1} parent=1 // pred_fallthru
      _
    // Predicated region
    $region10: #{tpu_custom_call.1} parent=1 // pred_check
      _
    $region11: #{tpu_custom_call.1} parent=1 // pred_check_branch
      %18 = sbr.rel (0) target = $region13
    $region12: #{tpu_custom_call.1} parent=1 // pred_region
      _
    $region13: #{tpu_custom_call.1} parent=1 // pred_fallthru
      _
    // Predicated region
    $region14: #{tpu_custom_call.1} parent=1 // pred_check
      _
    $region15: #{tpu_custom_call.1} parent=1 // pred_check_branch
      %20 = sbr.rel (0) target = $region17
    $region16: #{tpu_custom_call.1} parent=1 // pred_region
      _
    $region17: #{tpu_custom_call.1} parent=1 // pred_fallthru
      _
    // Predicated region
    $region18: #{tpu_custom_call.1} parent=1 // pred_check
      _
    $region19: #{tpu_custom_call.1} parent=1 // pred_check_branch
      %22 = sbr.rel (0) target = $region21
    $region20: #{tpu_custom_call.1} parent=1 // pred_region
      %s24 = ssub.s32 2048, 2048
      %25 = vsyncadd [#allocation3], %s24
      %s26 = sshll.u32 [#allocation2], 4
      %s27 = int_to_ptr.vmem [resolvable:$true] %s26
      %32 = dma.hbm_to_vmem [thread:$0]  %s4, 2048, %s27, [#allocation3], 256, 256, 16
    $region21: #{tpu_custom_call.1} parent=1 // pred_fallthru
      _
    // Predicated region
    $region22: #{tpu_custom_call.1} parent=1 // pred_check
      _
    $region23: #{tpu_custom_call.1} parent=1 // pred_check_branch
      %34 = sbr.rel (0) target = $region25
    $region24: #{tpu_custom_call.1} parent=1 // pred_region
      _
    $region25: #{tpu_custom_call.1} parent=1 // pred_fallthru
      _
    // Predicated region
    $region26: #{tpu_custom_call.1} parent=1 // pred_check
      _
    $region27: #{tpu_custom_call.1} parent=1 // pred_check_branch
      %36 = sbr.rel (0) target = $region29
    $region28: #{tpu_custom_call.1} parent=1 // pred_region
      %37 = dma.done [#allocation3], 2048
    $region29: #{tpu_custom_call.1} parent=1 // pred_fallthru
      _
    %v38 = vld [vmem:[%s1] sm:$0xff]
    %v39 = vld [vmem:[%s1 + $0x8] sm:$0xff]
    %v40 = vld [vmem:[%s0] sm:$0xff]
    %v41 = vld [vmem:[%s0 + $0x8] sm:$0xff]
    %v42 = vld [vmem:[%s2] sm:$0xff]
    %vm43 = vcmask 64512
    %v45 = vsel %vm43, %v40, 0
    %v48 = vsel %vm43, %v41, 0
    %50 = vmatprep.subr.mxu0 0.0
    %51 = vmatpush1.msra.mxu0 0.0
    %52 = vmatprep.subr.mxu0 0.0
    %53 = vmatpush1.msra.mxu0 0.0
    %54 = vmatprep.subr.mxu0 0.0
    %55 = vmatpush1.msra.mxu0 0.0
    %56 = vmatprep.subr.mxu0 0.0
    %57 = vmatpush1.msra.mxu0 0.0
    %58 = vmatprep.subr.mxu0 0.0
    %59 = vmatpush1.msra.mxu0 0.0
    %60 = vmatprep.subr.mxu0 0.0
    %61 = vmatpush1.msra.mxu0 0.0
    %62 = vmatprep.subr.mxu0 0.0
    %63 = vmatpush1.msra.mxu0 0.0
    %64 = vmatprep.subr.mxu0 0.0
    %65 = vmatpush1.msra.mxu0 0.0
    %66 = vmatprep.subr.mxu0 0.0
    %67 = vmatpush1.msra.mxu0 0.0
    %68 = vmatprep.subr.mxu0 0.0
    %69 = vmatpush1.msra.mxu0 0.0
    %70 = vmatprep.subr.mxu0 0.0
    %71 = vmatpush1.msra.mxu0 0.0
    %72 = vmatprep.subr.mxu0 0.0
    %73 = vmatpush1.msra.mxu0 0.0
    %74 = vmatprep.subr.mxu0 0.0
    %75 = vmatpush1.msra.mxu0 0.0
    %76 = vmatprep.subr.mxu0 0.0
    %77 = vmatpush1.msra.mxu0 0.0
    %78 = vmatprep.subr.mxu0 0.0
    %79 = vmatpush1.msra.mxu0 0.0
    %80 = vmatprep.subr.mxu0 0.0
    %81 = vmatpush1.msra.mxu0 %v42
    %82 = vmatprep.subr.mxu0 0.0
    %83 = vmatpush2.msra.mxu0 0.0
    %84 = vmatprep.subr.mxu0 0.0
    %85 = vmatpush2.msra.mxu0 0.0
    %86 = vmatprep.subr.mxu0 0.0
    %87 = vmatpush2.msra.mxu0 0.0
    %88 = vmatprep.subr.mxu0 0.0
    %89 = vmatpush2.msra.mxu0 0.0
    %90 = vmatprep.subr.mxu0 0.0
    %91 = vmatpush2.msra.mxu0 0.0
    %92 = vmatprep.subr.mxu0 0.0
    %93 = vmatpush2.msra.mxu0 0.0
    %94 = vmatprep.subr.mxu0 0.0
    %95 = vmatpush2.msra.mxu0 0.0
    %96 = vmatprep.subr.mxu0 0.0
    %97 = vmatpush2.msra.mxu0 0.0
    %98 = vmatprep.subr.mxu0 0.0
    %99 = vmatpush2.msra.mxu0 0.0
    %100 = vmatprep.subr.mxu0 0.0
    %101 = vmatpush2.msra.mxu0 0.0
    %102 = vmatprep.subr.mxu0 0.0
    %103 = vmatpush2.msra.mxu0 0.0
    %104 = vmatprep.subr.mxu0 0.0
    %105 = vmatpush2.msra.mxu0 0.0
    %106 = vmatprep.subr.mxu0 0.0
    %107 = vmatpush2.msra.mxu0 0.0
    %108 = vmatprep.subr.mxu0 0.0
    %109 = vmatpush2.msra.mxu0 0.0
    %110 = vmatprep.subr.mxu0 0.0
    %111 = vmatpush2.msra.mxu0 0.0
    %112 = vmatprep.subr.mxu0 0.0
    %113 = vmatpush2.msra.mxu0 0.0
    %114 = vmatprep.mubr.f32.mxu0 0.0
    %115 = vmatmul.mubr.f32.gmra.mxu0 %v45
    %v116 = vpop.f32.mrf.mxu0
    %v117 = vadd.f32 0.0, %v116
    %v118 = vpop.f32.mrf.mxu0
    %119 = vmatprep.mubr.f32.mxu0 0.0
    %120 = vmatmul.mubr.f32.gmra.mxu0 %v48
    %v121 = vpop.f32.mrf.mxu0
    %v122 = vadd.f32 0.0, %v121
    %v123 = vpop.f32.mrf.mxu0
    %124 = vdwg.mxu0
    %v125 = vld [vmem:[%s3] sm:$0x1]
    %v127 = vlaneseq
    %v128 = vshrl.u32 %v127, 7
    %v129 = vsub.s32 0, %v128
    %v130 = vrot.slane %v125, %v129
    %vm132 = vcmask 130048
    %v134 = vsel %vm132, %v38, 0
    %v137 = vsel %vm132, %v39, 0
    %139 = vmatprep.subr.mxu0 0.0
    %140 = vmatpush1.msra.mxu0 0.0
    %141 = vmatprep.subr.mxu0 0.0
    %142 = vmatpush1.msra.mxu0 0.0
    %143 = vmatprep.subr.mxu0 0.0
    %144 = vmatpush1.msra.mxu0 0.0
    %145 = vmatprep.subr.mxu0 0.0
    %146 = vmatpush1.msra.mxu0 0.0
    %147 = vmatprep.subr.mxu0 0.0
    %148 = vmatpush1.msra.mxu0 0.0
    %149 = vmatprep.subr.mxu0 0.0
    %150 = vmatpush1.msra.mxu0 0.0
    %151 = vmatprep.subr.mxu0 0.0
    %152 = vmatpush1.msra.mxu0 0.0
    %153 = vmatprep.subr.mxu0 0.0
    %154 = vmatpush1.msra.mxu0 0.0
    %155 = vmatprep.subr.mxu0 0.0
    %156 = vmatpush1.msra.mxu0 0.0
    %157 = vmatprep.subr.mxu0 0.0
    %158 = vmatpush1.msra.mxu0 0.0
    %159 = vmatprep.subr.mxu0 0.0
    %160 = vmatpush1.msra.mxu0 0.0
    %161 = vmatprep.subr.mxu0 0.0
    %162 = vmatpush1.msra.mxu0 0.0
    %163 = vmatprep.subr.mxu0 0.0
    %164 = vmatpush1.msra.mxu0 0.0
    %165 = vmatprep.subr.mxu0 0.0
    %166 = vmatpush1.msra.mxu0 0.0
    %167 = vmatprep.subr.mxu0 0.0
    %168 = vmatpush1.msra.mxu0 %v122
    %169 = vmatprep.subr.mxu0 0.0
    %170 = vmatpush1.msra.mxu0 %v117
    %171 = vmatprep.subr.mxu0 0.0
    %172 = vmatpush2.msra.mxu0 0.0
    %173 = vmatprep.subr.mxu0 0.0
    %174 = vmatpush2.msra.mxu0 0.0
    %175 = vmatprep.subr.mxu0 0.0
    %176 = vmatpush2.msra.mxu0 0.0
    %177 = vmatprep.subr.mxu0 0.0
    %178 = vmatpush2.msra.mxu0 0.0
    %179 = vmatprep.subr.mxu0 0.0
    %180 = vmatpush2.msra.mxu0 0.0
    %181 = vmatprep.subr.mxu0 0.0
    %182 = vmatpush2.msra.mxu0 0.0
    %183 = vmatprep.subr.mxu0 0.0
    %184 = vmatpush2.msra.mxu0 0.0
    %185 = vmatprep.subr.mxu0 0.0
    %186 = vmatpush2.msra.mxu0 0.0
    %187 = vmatprep.subr.mxu0 0.0
    %188 = vmatpush2.msra.mxu0 0.0
    %189 = vmatprep.subr.mxu0 0.0
    %190 = vmatpush2.msra.mxu0 0.0
    %191 = vmatprep.subr.mxu0 0.0
    %192 = vmatpush2.msra.mxu0 0.0
    %193 = vmatprep.subr.mxu0 0.0
    %194 = vmatpush2.msra.mxu0 0.0
    %195 = vmatprep.subr.mxu0 0.0
    %196 = vmatpush2.msra.mxu0 0.0
    %197 = vmatprep.subr.mxu0 0.0
    %198 = vmatpush2.msra.mxu0 0.0
    %199 = vmatprep.subr.mxu0 0.0
    %200 = vmatpush2.msra.mxu0 0.0
    %201 = vmatprep.subr.mxu0 0.0
    %202 = vmatpush2.msra.mxu0 0.0
    %203 = vmatprep.mubr.f32.mxu0 0.0
    %204 = vmatmul.mubr.f32.gmra.mxu0 %v134
    %v205 = vpop.f32.mrf.mxu0
    %v206 = vadd.f32 %v130, %v205
    %v207 = vpop.f32.mrf.mxu0
    %208 = vmatprep.mubr.f32.mxu0 0.0
    %209 = vmatmul.mubr.f32.gmra.mxu0 %v137
    %v210 = vpop.f32.mrf.mxu0
    %v211 = vadd.f32 %v130, %v210
    %v212 = vpop.f32.mrf.mxu0
    %213 = vdwg.mxu0
    %vm214 = vcmp.ge.f32.partialorder %v206, 0.0
    %vm215 = vcmp.ge.f32.partialorder %v211, 0.0
    %v216 = vmul.f32 %v206, 0.01
    %v217 = vmul.f32 %v211, 0.01
    %v218 = vsel %vm214, %v206, %v216
    %v219 = vsel %vm215, %v211, %v217
    %v220 = vld [vmem:[#allocation2] sm:$0xff]
    %v221 = vld [vmem:[#allocation2 + $0x8] sm:$0xff]
    %v222 = vld [vmem:[#allocation2 + $0x10] sm:$0xff]
    %v223 = vld [vmem:[#allocation2 + $0x18] sm:$0xff]
    %v224 = vld [vmem:[#allocation2 + $0x20] sm:$0xff]
    %v225 = vld [vmem:[#allocation2 + $0x28] sm:$0xff]
    %v226 = vld [vmem:[#allocation2 + $0x30] sm:$0xff]
    %v227 = vld [vmem:[#allocation2 + $0x38] sm:$0xff]
    %v228 = vld [vmem:[#allocation2 + $0x40] sm:$0xff]
    %v229 = vld [vmem:[#allocation2 + $0x48] sm:$0xff]
    %v230 = vld [vmem:[#allocation2 + $0x50] sm:$0xff]
    %v231 = vld [vmem:[#allocation2 + $0x58] sm:$0xff]
    %v232 = vld [vmem:[#allocation2 + $0x60] sm:$0xff]
    %v233 = vld [vmem:[#allocation2 + $0x68] sm:$0xff]
    %v234 = vld [vmem:[#allocation2 + $0x70] sm:$0xff]
    %v235 = vld [vmem:[#allocation2 + $0x78] sm:$0xff]
    %vm236 = vcmask 523264
    %v238 = vsel %vm236, %v218, 0
    %v241 = vsel %vm236, %v219, 0
    %243 = vmatprep.subr.mxu0 0.0
    %244 = vmatpush1.msra.mxu0 0.0
    %245 = vmatprep.subr.mxu0 0.0
    %246 = vmatpush1.msra.mxu0 0.0
    %247 = vmatprep.subr.mxu0 0.0
    %248 = vmatpush1.msra.mxu0 0.0
    %249 = vmatprep.subr.mxu0 0.0
    %250 = vmatpush1.msra.mxu0 0.0
    %251 = vmatprep.subr.mxu0 0.0
    %252 = vmatpush1.msra.mxu0 0.0
    %253 = vmatprep.subr.mxu0 0.0
    %254 = vmatpush1.msra.mxu0 0.0
    %255 = vmatprep.subr.mxu0 0.0
    %256 = vmatpush1.msra.mxu0 0.0
    %257 = vmatprep.subr.mxu0 0.0
    %258 = vmatpush1.msra.mxu0 0.0
    %259 = vmatprep.subr.mxu0 %v235
    %260 = vmatpush1.msra.mxu0 %v234
    %261 = vmatprep.subr.mxu0 %v233
    %262 = vmatpush1.msra.mxu0 %v232
    %263 = vmatprep.subr.mxu0 %v231
    %264 = vmatpush1.msra.mxu0 %v230
    %265 = vmatprep.subr.mxu0 %v229
    %266 = vmatpush1.msra.mxu0 %v228
    %267 = vmatprep.subr.mxu0 %v227
    %268 = vmatpush1.msra.mxu0 %v226
    %269 = vmatprep.subr.mxu0 %v225
    %270 = vmatpush1.msra.mxu0 %v224
    %271 = vmatprep.subr.mxu0 %v223
    %272 = vmatpush1.msra.mxu0 %v222
    %273 = vmatprep.subr.mxu0 %v221
    %274 = vmatpush1.msra.mxu0 %v220
    %275 = vmatprep.subr.mxu0 0.0
    %276 = vmatpush2.msra.mxu0 0.0
    %277 = vmatprep.subr.mxu0 0.0
    %278 = vmatpush2.msra.mxu0 0.0
    %279 = vmatprep.subr.mxu0 0.0
    %280 = vmatpush2.msra.mxu0 0.0
    %281 = vmatprep.subr.mxu0 0.0
    %282 = vmatpush2.msra.mxu0 0.0
    %283 = vmatprep.subr.mxu0 0.0
    %284 = vmatpush2.msra.mxu0 0.0
    %285 = vmatprep.subr.mxu0 0.0
    %286 = vmatpush2.msra.mxu0 0.0
    %287 = vmatprep.subr.mxu0 0.0
    %288 = vmatpush2.msra.mxu0 0.0
    %289 = vmatprep.subr.mxu0 0.0
    %290 = vmatpush2.msra.mxu0 0.0
    %291 = vmatprep.subr.mxu0 0.0
    %292 = vmatpush2.msra.mxu0 0.0
    %293 = vmatprep.subr.mxu0 0.0
    %294 = vmatpush2.msra.mxu0 0.0
    %295 = vmatprep.subr.mxu0 0.0
    %296 = vmatpush2.msra.mxu0 0.0
    %297 = vmatprep.subr.mxu0 0.0
    %298 = vmatpush2.msra.mxu0 0.0
    %299 = vmatprep.subr.mxu0 0.0
    %300 = vmatpush2.msra.mxu0 0.0
    %301 = vmatprep.subr.mxu0 0.0
    %302 = vmatpush2.msra.mxu0 0.0
    %303 = vmatprep.subr.mxu0 0.0
    %304 = vmatpush2.msra.mxu0 0.0
    %305 = vmatprep.subr.mxu0 0.0
    %306 = vmatpush2.msra.mxu0 0.0
    %307 = vmatprep.mubr.f32.mxu0 0.0
    %308 = vmatmul.mubr.f32.gmra.mxu0 %v238
    %v309 = vpop.f32.mrf.mxu0
    %v310 = vadd.f32 0.0, %v309
    %v311 = vpop.f32.mrf.mxu0
    %v312 = vadd.f32 0.0, %v311
    %313 = vmatprep.mubr.f32.mxu0 0.0
    %314 = vmatmul.mubr.f32.gmra.mxu0 %v241
    %v315 = vpop.f32.mrf.mxu0
    %v316 = vadd.f32 0.0, %v315
    %v317 = vpop.f32.mrf.mxu0
    %v318 = vadd.f32 0.0, %v317
    %319 = vdwg.mxu0
    %v320 = vld [vmem:[%s5] sm:$0x3]
    %v322 = vlaneseq
    %v323 = vshrl.u32 %v322, 7
    %v324 = vsub.s32 0, %v323
    %v325 = vrot.slane %v320, %v324
    %v326 = vlaneseq
    %v327 = vshrl.u32 %v326, 7
    %v328 = vsub.s32 1, %v327
    %v329 = vrot.slane %v320, %v328
    %332 = vmatprep.subr.mxu0 0.0
    %333 = vmatpush1.msra.mxu0 0.0
    %334 = vmatprep.subr.mxu0 0.0
    %335 = vmatpush1.msra.mxu0 0.0
    %336 = vmatprep.subr.mxu0 0.0
    %337 = vmatpush1.msra.mxu0 0.0
    %338 = vmatprep.subr.mxu0 0.0
    %339 = vmatpush1.msra.mxu0 0.0
    %340 = vmatprep.subr.mxu0 0.0
    %341 = vmatpush1.msra.mxu0 0.0
    %342 = vmatprep.subr.mxu0 0.0
    %343 = vmatpush1.msra.mxu0 0.0
    %344 = vmatprep.subr.mxu0 0.0
    %345 = vmatpush1.msra.mxu0 0.0
    %346 = vmatprep.subr.mxu0 0.0
    %347 = vmatpush1.msra.mxu0 0.0
    %348 = vmatprep.subr.mxu0 0.0
    %349 = vmatpush1.msra.mxu0 0.0
    %350 = vmatprep.subr.mxu0 0.0
    %351 = vmatpush1.msra.mxu0 0.0
    %352 = vmatprep.subr.mxu0 0.0
    %353 = vmatpush1.msra.mxu0 0.0
    %354 = vmatprep.subr.mxu0 0.0
    %355 = vmatpush1.msra.mxu0 0.0
    %356 = vmatprep.subr.mxu0 0.0
    %357 = vmatpush1.msra.mxu0 0.0
    %358 = vmatprep.subr.mxu0 0.0
    %359 = vmatpush1.msra.mxu0 0.0
    %360 = vmatprep.subr.mxu0 %v318
    %361 = vmatpush1.msra.mxu0 %v316
    %362 = vmatprep.subr.mxu0 %v312
    %363 = vmatpush1.msra.mxu0 %v310
    %364 = vmatprep.subr.mxu0 0.0
    %365 = vmatpush2.msra.mxu0 0.0
    %366 = vmatprep.subr.mxu0 0.0
    %367 = vmatpush2.msra.mxu0 0.0
    %368 = vmatprep.subr.mxu0 0.0
    %369 = vmatpush2.msra.mxu0 0.0
    %370 = vmatprep.subr.mxu0 0.0
    %371 = vmatpush2.msra.mxu0 0.0
    %372 = vmatprep.subr.mxu0 0.0
    %373 = vmatpush2.msra.mxu0 0.0
    %374 = vmatprep.subr.mxu0 0.0
    %375 = vmatpush2.msra.mxu0 0.0
    %376 = vmatprep.subr.mxu0 0.0
    %377 = vmatpush2.msra.mxu0 0.0
    %378 = vmatprep.subr.mxu0 0.0
    %379 = vmatpush2.msra.mxu0 0.0
    %380 = vmatprep.subr.mxu0 0.0
    %381 = vmatpush2.msra.mxu0 0.0
    %382 = vmatprep.subr.mxu0 0.0
    %383 = vmatpush2.msra.mxu0 0.0
    %384 = vmatprep.subr.mxu0 0.0
    %385 = vmatpush2.msra.mxu0 0.0
    %386 = vmatprep.subr.mxu0 0.0
    %387 = vmatpush2.msra.mxu0 0.0
    %388 = vmatprep.subr.mxu0 0.0
    %389 = vmatpush2.msra.mxu0 0.0
    %390 = vmatprep.subr.mxu0 0.0
    %391 = vmatpush2.msra.mxu0 0.0
    %392 = vmatprep.subr.mxu0 0.0
    %393 = vmatpush2.msra.mxu0 0.0
    %394 = vmatprep.subr.mxu0 0.0
    %395 = vmatpush2.msra.mxu0 0.0
    %396 = vmatprep.mubr.f32.mxu0 0.0
    %397 = vmatmul.mubr.f32.gmra.mxu0 %v134
    %v398 = vpop.f32.mrf.mxu0
    %v399 = vadd.f32 %v325, %v398
    %v400 = vpop.f32.mrf.mxu0
    %v401 = vadd.f32 %v329, %v400
    %402 = vmatprep.mubr.f32.mxu0 0.0
    %403 = vmatmul.mubr.f32.gmra.mxu0 %v137
    %v404 = vpop.f32.mrf.mxu0
    %v405 = vadd.f32 %v325, %v404
    %v406 = vpop.f32.mrf.mxu0
    %v407 = vadd.f32 %v329, %v406
    %408 = vdwg.mxu0
    %409 = vst [vmem:[#allocation5] sm:$0xff] %v399
    %410 = vst [vmem:[#allocation5 + $0x8] sm:$0xff] %v401
    %411 = vst [vmem:[#allocation5 + $0x10] sm:$0xff] %v405
    %412 = vst [vmem:[#allocation5 + $0x18] sm:$0xff] %v407
    // Predicated region
    $region30: #{tpu_custom_call.1} parent=1 // pred_check
      _
    $region31: #{tpu_custom_call.1} parent=1 // pred_check_branch
      %414 = sbr.rel (0) target = $region33
    $region32: #{tpu_custom_call.1} parent=1 // pred_region
      %s416 = ssub.s32 512, 512
      %417 = vsyncadd [#allocation4], %s416
      %s418 = sshll.u32 [#allocation5], 4
      %s419 = int_to_ptr.vmem [resolvable:$true] %s418
      %424 = dma.vmem_to_hbm [thread:$0]  %s419, 512, %s6, [#allocation4], 256, 256, 16
    $region33: #{tpu_custom_call.1} parent=1 // pred_fallthru
      _
    // Predicated region
    $region34: #{tpu_custom_call.1} parent=1 // pred_check
      _
    $region35: #{tpu_custom_call.1} parent=1 // pred_check_branch
      %426 = sbr.rel (0) target = $region37
    $region36: #{tpu_custom_call.1} parent=1 // pred_region
      %427 = dma.done [#allocation4], 512
    $region37: #{tpu_custom_call.1} parent=1 // pred_fallthru
      _
    %428 = vsyncpa [#allocation3], 1
    %429 = vsyncpa [#allocation4], 1

</llo_original>
